<compile_context>
chip_gen: v5e
topology: v5e:2x2
jax: 0.10.0
libtpu: 0.0.40
codegen_flags: <defaults>
</compile_context>

<pallas_src>
import functools

import jax
import jax.numpy as jnp
from jax.experimental import pallas as pl
from jax.experimental.pallas import tpu as pltpu


def _bidir_cost_volume_kernel(f1_ref, f2_ref, out_ref, *, lvls, chunk):
    # f1_ref / f2_ref: (1, fs, TH, W) VMEM tiles; out_ref: (1, 2*lvls+1, TH, W).
    fs = f1_ref.shape[1]
    th = f1_ref.shape[2]
    w = f1_ref.shape[3]
    n_out = 2 * lvls + 1
    inv_fs = jnp.float32(1.0 / fs)

    # Hoisted column indices, reused for every level's validity mask.
    col = jax.lax.broadcasted_iota(jnp.int32, (th, w), 1)

    # Channel-outer accumulation: read each feature chunk once, reuse it for all
    # disparity levels. Accumulate in f32 regardless of the input dtype.
    accs = [jnp.zeros((th, w), jnp.float32) for _ in range(n_out)]
    for c0 in range(0, fs, chunk):
        cc = min(chunk, fs - c0)
        f1c = f1_ref[0, pl.ds(c0, cc), :, :].astype(jnp.float32)
        f2c = f2_ref[0, pl.ds(c0, cc), :, :].astype(jnp.float32)
        for i in range(-lvls, lvls + 1):
            # Circular lane rotation (XLU); wrapped columns are masked below.
            shift = i % w
            f2s = f2c if shift == 0 else pltpu.roll(f2c, shift=shift, axis=2)
            accs[lvls + i] = accs[lvls + i] + jnp.sum(f1c * f2s, axis=0)

    for i in range(-lvls, lvls + 1):
        cost = accs[lvls + i] * inv_fs
        # Zero exactly where the reference leaves new_zeros() untouched
        # (these are also the columns polluted by the roll wrap-around).
        if i > 0:
            cost = jnp.where(col >= i, cost, 0.0)
        elif i < 0:
            cost = jnp.where(col < w + i, cost, 0.0)
        out_ref[0, lvls + i] = cost.astype(out_ref.dtype)


def _round_up(x, m):
    return (x + m - 1) // m * m


def cost_volume_bidirectional(features_1, features_2, disparity_lvls, *,
                              h_tile=None, channel_chunk=8,
                              vmem_tile_budget_bytes=8 * 1024 * 1024):
    assert features_1.shape == features_2.shape
    assert features_1.ndim == 4
    bs, fs, h, w = features_1.shape
    n_out = 2 * disparity_lvls + 1
    dtype = features_1.dtype

    # Lane-dense layout: pad W to a multiple of 128 and H to a multiple of 8.
    # Zero padding is inert: padded f1 columns/rows give zero cost (sliced off),
    # and shifted reads that land in the f2 pad produce exactly the zeros the
    # reference leaves untouched.
    wp = _round_up(w, 128)
    hp = _round_up(h, 8)
    if (wp, hp) != (w, h):
        pad = ((0, 0), (0, 0), (0, hp - h), (0, wp - w))
        features_1 = jnp.pad(features_1, pad)
        features_2 = jnp.pad(features_2, pad)

    # H tile: largest multiple-of-8 divisor of hp whose double-buffered working
    # set (2x f1 + 2x f2 + 2x out tiles) stays under the budget. The disparity
    # shift is along W only, so H tiling needs no halo.
    itemsize = jnp.dtype(dtype).itemsize
    per_row_bytes = (2 * 2 * fs + 2 * n_out) * wp * itemsize
    if h_tile is None:
        max_rows = max(8, vmem_tile_budget_bytes // max(per_row_bytes, 1))
        h_tile = 8 if hp % 8 == 0 else hp
        for cand in range(8, hp + 1, 8):
            if hp % cand == 0 and cand <= max_rows:
                h_tile = cand
    assert hp % h_tile == 0

    kernel = functools.partial(
        _bidir_cost_volume_kernel,
        lvls=disparity_lvls,
        chunk=min(channel_chunk, fs),
    )

    out = pl.pallas_call(
        kernel,
        out_shape=jax.ShapeDtypeStruct((bs, n_out, hp, wp), dtype),
        grid_spec=pltpu.PrefetchScalarGridSpec(
            num_scalar_prefetch=0,
            grid=(bs, hp // h_tile),
            in_specs=[
                pl.BlockSpec((1, fs, h_tile, wp), lambda b, t: (b, 0, t, 0)),
                pl.BlockSpec((1, fs, h_tile, wp), lambda b, t: (b, 0, t, 0)),
            ],
            out_specs=pl.BlockSpec((1, n_out, h_tile, wp),
                                   lambda b, t: (b, 0, t, 0)),
        ),
        compiler_params=pltpu.CompilerParams(
            dimension_semantics=("parallel", "parallel"),
            vmem_limit_bytes=32 * 1024 * 1024,
        ),
    )(features_1, features_2)

    if (wp, hp) != (w, h):
        out = out[:, :, :h, :w]
    return out


def cost_volume_bidirectional_ref(f1, f2, lvls):
    # Pure-JAX reference mirroring the PyTorch forward.
    bs, fs, h, w = f1.shape
    out = jnp.zeros((bs, 2 * lvls + 1, h, w), f1.dtype)
    for i in range(-lvls, lvls + 1):
        x0, x1 = max(i, 0), min(w, w + i)
        y0, y1 = max(-i, 0), min(w, w - i)
        corr = (f1[:, :, :, x0:x1] * f2[:, :, :, y0:y1]).mean(axis=1)
        out = out.at[:, lvls + i, :, x0:x1].set(corr)
    return out


if __name__ == "__main__":
    key = jax.random.PRNGKey(0)

    # Main test: lane-dense W (multiple of 128).
    bs, fs, h, w = 2, 4, 16, 128
    lvls = 3
    k1, k2, k3, k4 = jax.random.split(key, 4)
    f1 = jax.random.normal(k1, (bs, fs, h, w), dtype=jnp.float32)
    f2 = jax.random.normal(k2, (bs, fs, h, w), dtype=jnp.float32)

    out = cost_volume_bidirectional(f1, f2, lvls)
    out = jax.block_until_ready(out)
    ref = cost_volume_bidirectional_ref(f1, f2, lvls)
    assert out.shape == (bs, 2 * lvls + 1, h, w)
    assert jnp.allclose(out, ref, atol=1e-5, rtol=1e-5), "mismatch vs reference"

    # Secondary test: ragged spatial dims exercising the pad/slice path.
    bs2, fs2, h2, w2, lvls2 = 1, 3, 12, 16, 2
    g1 = jax.random.normal(k3, (bs2, fs2, h2, w2), dtype=jnp.float32)
    g2 = jax.random.normal(k4, (bs2, fs2, h2, w2), dtype=jnp.float32)

    out2 = cost_volume_bidirectional(g1, g2, lvls2)
    out2 = jax.block_until_ready(out2)
    ref2 = cost_volume_bidirectional_ref(g1, g2, lvls2)
    assert out2.shape == (bs2, 2 * lvls2 + 1, h2, w2)
    assert jnp.allclose(out2, ref2, atol=1e-5, rtol=1e-5), "mismatch (padded path)"

    print("KERNEL_OK")
</pallas_src>

<mosaic_0001>
module attributes {stable_mosaic.version = 11 : i64} {
  func.func @_bidir_cost_volume_kernel(%arg0: i32, %arg1: i32, %arg2: memref<1x4x16x128xf32, #tpu.memory_space<vmem>>, %arg3: memref<1x4x16x128xf32, #tpu.memory_space<vmem>>, %arg4: memref<1x7x16x128xf32, #tpu.memory_space<vmem>>) attributes {dimension_semantics = [#tpu.dimension_semantics<parallel>, #tpu.dimension_semantics<parallel>], iteration_bounds = array<i64: 2, 1>, scalar_prefetch = 0 : i64, scratch_operands = 0 : i64, tpu.core_type = #tpu.core_type<tc>, window_params = [{transform_indices = @transform_0, window_bounds = array<i64: 1, 4, 16, 128>}, {transform_indices = @transform_1, window_bounds = array<i64: 1, 4, 16, 128>}, {transform_indices = @transform_2, window_bounds = array<i64: 1, 7, 16, 128>}]} {
    %0 = tpu.iota {dimensions = array<i32: 1>} : vector<16x128xi32>
    %cst = arith.constant 0.000000e+00 : f32
    %1 = vector.broadcast %cst : f32 to vector<16x128xf32>
    %cst_0 = arith.constant 0.000000e+00 : f32
    %2 = vector.broadcast %cst_0 : f32 to vector<16x128xf32>
    %cst_1 = arith.constant 0.000000e+00 : f32
    %3 = vector.broadcast %cst_1 : f32 to vector<16x128xf32>
    %cst_2 = arith.constant 0.000000e+00 : f32
    %4 = vector.broadcast %cst_2 : f32 to vector<16x128xf32>
    %cst_3 = arith.constant 0.000000e+00 : f32
    %5 = vector.broadcast %cst_3 : f32 to vector<16x128xf32>
    %cst_4 = arith.constant 0.000000e+00 : f32
    %6 = vector.broadcast %cst_4 : f32 to vector<16x128xf32>
    %cst_5 = arith.constant 0.000000e+00 : f32
    %7 = vector.broadcast %cst_5 : f32 to vector<16x128xf32>
    %c0 = arith.constant 0 : index
    %c0_6 = arith.constant 0 : index
    %c0_7 = arith.constant 0 : index
    %c0_8 = arith.constant 0 : index
    %8 = vector.load %arg2[%c0, %c0_6, %c0_7, %c0_8] : memref<1x4x16x128xf32, #tpu.memory_space<vmem>>, vector<1x4x16x128xf32>
    %9 = vector.shape_cast %8 : vector<1x4x16x128xf32> to vector<4x16x128xf32>
    %c0_9 = arith.constant 0 : index
    %c0_10 = arith.constant 0 : index
    %c0_11 = arith.constant 0 : index
    %c0_12 = arith.constant 0 : index
    %10 = vector.load %arg3[%c0_9, %c0_10, %c0_11, %c0_12] : memref<1x4x16x128xf32, #tpu.memory_space<vmem>>, vector<1x4x16x128xf32>
    %11 = vector.shape_cast %10 : vector<1x4x16x128xf32> to vector<4x16x128xf32>
    %c125_i32 = arith.constant 125 : i32
    %12 = tpu.dynamic_rotate %11 by %c125_i32 dim 2 : vector<4x16x128xf32>, i32 -> vector<4x16x128xf32>
    %13 = arith.mulf %9, %12 : vector<4x16x128xf32>
    %cst_13 = arith.constant dense<0.000000e+00> : vector<16x128xf32>
    %14 = vector.multi_reduction <add>, %13, %cst_13 [0] : vector<4x16x128xf32> to vector<16x128xf32>
    %15 = arith.addf %1, %14 : vector<16x128xf32>
    %c126_i32 = arith.constant 126 : i32
    %16 = tpu.dynamic_rotate %11 by %c126_i32 dim 2 : vector<4x16x128xf32>, i32 -> vector<4x16x128xf32>
    %17 = arith.mulf %9, %16 : vector<4x16x128xf32>
    %cst_14 = arith.constant dense<0.000000e+00> : vector<16x128xf32>
    %18 = vector.multi_reduction <add>, %17, %cst_14 [0] : vector<4x16x128xf32> to vector<16x128xf32>
    %19 = arith.addf %2, %18 : vector<16x128xf32>
    %c127_i32 = arith.constant 127 : i32
    %20 = tpu.dynamic_rotate %11 by %c127_i32 dim 2 : vector<4x16x128xf32>, i32 -> vector<4x16x128xf32>
    %21 = arith.mulf %9, %20 : vector<4x16x128xf32>
    %cst_15 = arith.constant dense<0.000000e+00> : vector<16x128xf32>
    %22 = vector.multi_reduction <add>, %21, %cst_15 [0] : vector<4x16x128xf32> to vector<16x128xf32>
    %23 = arith.addf %3, %22 : vector<16x128xf32>
    %24 = arith.mulf %9, %11 : vector<4x16x128xf32>
    %cst_16 = arith.constant dense<0.000000e+00> : vector<16x128xf32>
    %25 = vector.multi_reduction <add>, %24, %cst_16 [0] : vector<4x16x128xf32> to vector<16x128xf32>
    %26 = arith.addf %4, %25 : vector<16x128xf32>
    %c1_i32 = arith.constant 1 : i32
    %27 = tpu.dynamic_rotate %11 by %c1_i32 dim 2 : vector<4x16x128xf32>, i32 -> vector<4x16x128xf32>
    %28 = arith.mulf %9, %27 : vector<4x16x128xf32>
    %cst_17 = arith.constant dense<0.000000e+00> : vector<16x128xf32>
    %29 = vector.multi_reduction <add>, %28, %cst_17 [0] : vector<4x16x128xf32> to vector<16x128xf32>
    %30 = arith.addf %5, %29 : vector<16x128xf32>
    %c2_i32 = arith.constant 2 : i32
    %31 = tpu.dynamic_rotate %11 by %c2_i32 dim 2 : vector<4x16x128xf32>, i32 -> vector<4x16x128xf32>
    %32 = arith.mulf %9, %31 : vector<4x16x128xf32>
    %cst_18 = arith.constant dense<0.000000e+00> : vector<16x128xf32>
    %33 = vector.multi_reduction <add>, %32, %cst_18 [0] : vector<4x16x128xf32> to vector<16x128xf32>
    %34 = arith.addf %6, %33 : vector<16x128xf32>
    %c3_i32 = arith.constant 3 : i32
    %35 = tpu.dynamic_rotate %11 by %c3_i32 dim 2 : vector<4x16x128xf32>, i32 -> vector<4x16x128xf32>
    %36 = arith.mulf %9, %35 : vector<4x16x128xf32>
    %cst_19 = arith.constant dense<0.000000e+00> : vector<16x128xf32>
    %37 = vector.multi_reduction <add>, %36, %cst_19 [0] : vector<4x16x128xf32> to vector<16x128xf32>
    %38 = arith.addf %7, %37 : vector<16x128xf32>
    %cst_20 = arith.constant 2.500000e-01 : f32
    %39 = vector.broadcast %cst_20 : f32 to vector<16x128xf32>
    %40 = arith.mulf %15, %39 : vector<16x128xf32>
    %c125_i32_21 = arith.constant 125 : i32
    %41 = vector.broadcast %c125_i32_21 : i32 to vector<16x128xi32>
    %42 = arith.cmpi slt, %0, %41 : vector<16x128xi32>
    %cst_22 = arith.constant 0.000000e+00 : f32
    %43 = vector.broadcast %cst_22 : f32 to vector<16x128xf32>
    %44 = arith.select %42, %40, %43 : vector<16x128xi1>, vector<16x128xf32>
    %c0_23 = arith.constant 0 : index
    %c0_24 = arith.constant 0 : index
    %c0_25 = arith.constant 0 : index
    %c0_26 = arith.constant 0 : index
    %45 = vector.load %arg4[%c0_23, %c0_24, %c0_25, %c0_26] : memref<1x7x16x128xf32, #tpu.memory_space<vmem>>, vector<1x1x16x128xf32>
    %46 = vector.shape_cast %45 : vector<1x1x16x128xf32> to vector<16x128xf32>
    %47 = vector.shape_cast %44 : vector<16x128xf32> to vector<1x1x16x128xf32>
    tpu.vector_store %arg4[%c0_23, %c0_24, %c0_25, %c0_26], %47 {strides = array<i32>} : memref<1x7x16x128xf32, #tpu.memory_space<vmem>>, vector<1x1x16x128xf32>,
    %cst_27 = arith.constant 2.500000e-01 : f32
    %48 = vector.broadcast %cst_27 : f32 to vector<16x128xf32>
    %49 = arith.mulf %19, %48 : vector<16x128xf32>
    %c126_i32_28 = arith.constant 126 : i32
    %50 = vector.broadcast %c126_i32_28 : i32 to vector<16x128xi32>
    %51 = arith.cmpi slt, %0, %50 : vector<16x128xi32>
    %cst_29 = arith.constant 0.000000e+00 : f32
    %52 = vector.broadcast %cst_29 : f32 to vector<16x128xf32>
    %53 = arith.select %51, %49, %52 : vector<16x128xi1>, vector<16x128xf32>
    %c0_30 = arith.constant 0 : index
    %c1 = arith.constant 1 : index
    %c0_31 = arith.constant 0 : index
    %c0_32 = arith.constant 0 : index
    %54 = vector.load %arg4[%c0_30, %c1, %c0_31, %c0_32] : memref<1x7x16x128xf32, #tpu.memory_space<vmem>>, vector<1x1x16x128xf32>
    %55 = vector.shape_cast %54 : vector<1x1x16x128xf32> to vector<16x128xf32>
    %56 = vector.shape_cast %53 : vector<16x128xf32> to vector<1x1x16x128xf32>
    tpu.vector_store %arg4[%c0_30, %c1, %c0_31, %c0_32], %56 {strides = array<i32>} : memref<1x7x16x128xf32, #tpu.memory_space<vmem>>, vector<1x1x16x128xf32>,
    %cst_33 = arith.constant 2.500000e-01 : f32
    %57 = vector.broadcast %cst_33 : f32 to vector<16x128xf32>
    %58 = arith.mulf %23, %57 : vector<16x128xf32>
    %c127_i32_34 = arith.constant 127 : i32
    %59 = vector.broadcast %c127_i32_34 : i32 to vector<16x128xi32>
    %60 = arith.cmpi slt, %0, %59 : vector<16x128xi32>
    %cst_35 = arith.constant 0.000000e+00 : f32
    %61 = vector.broadcast %cst_35 : f32 to vector<16x128xf32>
    %62 = arith.select %60, %58, %61 : vector<16x128xi1>, vector<16x128xf32>
    %c0_36 = arith.constant 0 : index
    %c2 = arith.constant 2 : index
    %c0_37 = arith.constant 0 : index
    %c0_38 = arith.constant 0 : index
    %63 = vector.load %arg4[%c0_36, %c2, %c0_37, %c0_38] : memref<1x7x16x128xf32, #tpu.memory_space<vmem>>, vector<1x1x16x128xf32>
    %64 = vector.shape_cast %63 : vector<1x1x16x128xf32> to vector<16x128xf32>
    %65 = vector.shape_cast %62 : vector<16x128xf32> to vector<1x1x16x128xf32>
    tpu.vector_store %arg4[%c0_36, %c2, %c0_37, %c0_38], %65 {strides = array<i32>} : memref<1x7x16x128xf32, #tpu.memory_space<vmem>>, vector<1x1x16x128xf32>,
    %cst_39 = arith.constant 2.500000e-01 : f32
    %66 = vector.broadcast %cst_39 : f32 to vector<16x128xf32>
    %67 = arith.mulf %26, %66 : vector<16x128xf32>
    %c0_40 = arith.constant 0 : index
    %c3 = arith.constant 3 : index
    %c0_41 = arith.constant 0 : index
    %c0_42 = arith.constant 0 : index
    %68 = vector.load %arg4[%c0_40, %c3, %c0_41, %c0_42] : memref<1x7x16x128xf32, #tpu.memory_space<vmem>>, vector<1x1x16x128xf32>
    %69 = vector.shape_cast %68 : vector<1x1x16x128xf32> to vector<16x128xf32>
    %70 = vector.shape_cast %67 : vector<16x128xf32> to vector<1x1x16x128xf32>
    tpu.vector_store %arg4[%c0_40, %c3, %c0_41, %c0_42], %70 {strides = array<i32>} : memref<1x7x16x128xf32, #tpu.memory_space<vmem>>, vector<1x1x16x128xf32>,
    %cst_43 = arith.constant 2.500000e-01 : f32
    %71 = vector.broadcast %cst_43 : f32 to vector<16x128xf32>
    %72 = arith.mulf %30, %71 : vector<16x128xf32>
    %c1_i32_44 = arith.constant 1 : i32
    %73 = vector.broadcast %c1_i32_44 : i32 to vector<16x128xi32>
    %74 = arith.cmpi sge, %0, %73 : vector<16x128xi32>
    %cst_45 = arith.constant 0.000000e+00 : f32
    %75 = vector.broadcast %cst_45 : f32 to vector<16x128xf32>
    %76 = arith.select %74, %72, %75 : vector<16x128xi1>, vector<16x128xf32>
    %c0_46 = arith.constant 0 : index
    %c4 = arith.constant 4 : index
    %c0_47 = arith.constant 0 : index
    %c0_48 = arith.constant 0 : index
    %77 = vector.load %arg4[%c0_46, %c4, %c0_47, %c0_48] : memref<1x7x16x128xf32, #tpu.memory_space<vmem>>, vector<1x1x16x128xf32>
    %78 = vector.shape_cast %77 : vector<1x1x16x128xf32> to vector<16x128xf32>
    %79 = vector.shape_cast %76 : vector<16x128xf32> to vector<1x1x16x128xf32>
    tpu.vector_store %arg4[%c0_46, %c4, %c0_47, %c0_48], %79 {strides = array<i32>} : memref<1x7x16x128xf32, #tpu.memory_space<vmem>>, vector<1x1x16x128xf32>,
    %cst_49 = arith.constant 2.500000e-01 : f32
    %80 = vector.broadcast %cst_49 : f32 to vector<16x128xf32>
    %81 = arith.mulf %34, %80 : vector<16x128xf32>
    %c2_i32_50 = arith.constant 2 : i32
    %82 = vector.broadcast %c2_i32_50 : i32 to vector<16x128xi32>
    %83 = arith.cmpi sge, %0, %82 : vector<16x128xi32>
    %cst_51 = arith.constant 0.000000e+00 : f32
    %84 = vector.broadcast %cst_51 : f32 to vector<16x128xf32>
    %85 = arith.select %83, %81, %84 : vector<16x128xi1>, vector<16x128xf32>
    %c0_52 = arith.constant 0 : index
    %c5 = arith.constant 5 : index
    %c0_53 = arith.constant 0 : index
    %c0_54 = arith.constant 0 : index
    %86 = vector.load %arg4[%c0_52, %c5, %c0_53, %c0_54] : memref<1x7x16x128xf32, #tpu.memory_space<vmem>>, vector<1x1x16x128xf32>
    %87 = vector.shape_cast %86 : vector<1x1x16x128xf32> to vector<16x128xf32>
    %88 = vector.shape_cast %85 : vector<16x128xf32> to vector<1x1x16x128xf32>
    tpu.vector_store %arg4[%c0_52, %c5, %c0_53, %c0_54], %88 {strides = array<i32>} : memref<1x7x16x128xf32, #tpu.memory_space<vmem>>, vector<1x1x16x128xf32>,
    %cst_55 = arith.constant 2.500000e-01 : f32
    %89 = vector.broadcast %cst_55 : f32 to vector<16x128xf32>
    %90 = arith.mulf %38, %89 : vector<16x128xf32>
    %c3_i32_56 = arith.constant 3 : i32
    %91 = vector.broadcast %c3_i32_56 : i32 to vector<16x128xi32>
    %92 = arith.cmpi sge, %0, %91 : vector<16x128xi32>
    %cst_57 = arith.constant 0.000000e+00 : f32
    %93 = vector.broadcast %cst_57 : f32 to vector<16x128xf32>
    %94 = arith.select %92, %90, %93 : vector<16x128xi1>, vector<16x128xf32>
    %c0_58 = arith.constant 0 : index
    %c6 = arith.constant 6 : index
    %c0_59 = arith.constant 0 : index
    %c0_60 = arith.constant 0 : index
    %95 = vector.load %arg4[%c0_58, %c6, %c0_59, %c0_60] : memref<1x7x16x128xf32, #tpu.memory_space<vmem>>, vector<1x1x16x128xf32>
    %96 = vector.shape_cast %95 : vector<1x1x16x128xf32> to vector<16x128xf32>
    %97 = vector.shape_cast %94 : vector<16x128xf32> to vector<1x1x16x128xf32>
    tpu.vector_store %arg4[%c0_58, %c6, %c0_59, %c0_60], %97 {strides = array<i32>} : memref<1x7x16x128xf32, #tpu.memory_space<vmem>>, vector<1x1x16x128xf32>,
    return
  }
  func.func @transform_0(%arg0: i32, %arg1: i32) -> (i32, i32, i32, i32) {
    %c0_i32 = arith.constant 0 : i32
    %c0_i32_0 = arith.constant 0 : i32
    %c0_i32_1 = arith.constant 0 : i32
    return %arg0, %c0_i32, %arg1, %c0_i32_0 : i32, i32, i32, i32
  }
  func.func @transform_1(%arg0: i32, %arg1: i32) -> (i32, i32, i32, i32) {
    %c0_i32 = arith.constant 0 : i32
    %c0_i32_0 = arith.constant 0 : i32
    %c0_i32_1 = arith.constant 0 : i32
    return %arg0, %c0_i32, %arg1, %c0_i32_0 : i32, i32, i32, i32
  }
  func.func @transform_2(%arg0: i32, %arg1: i32) -> (i32, i32, i32, i32) {
    %c0_i32 = arith.constant 0 : i32
    %c0_i32_0 = arith.constant 0 : i32
    %c0_i32_1 = arith.constant 0 : i32
    return %arg0, %c0_i32, %arg1, %c0_i32_0 : i32, i32, i32, i32
  }
}

</mosaic_0001>

<llo_original>
// kernel: tpu_custom_call.1
$region0: #{tpu_custom_call.1}
  #allocation0 [shape = 'u32[]', space=smem, size = 0x4, offset = 0x4, fixed_abs, tag = 'smem constant byte address 0x4 - core index']
  #allocation1 [shape = 'u32[72,128]{1,0:T(1,128)}', space=vmem, size = 0x9000, scoped, tag = 'internal scratch']
  %s0 = inlined_call_operand.hbm [shape: f32[2,4,16,128], index: 0, kind: input, shape index: {}]
  %s1 = inlined_call_operand.hbm [shape: f32[2,4,16,128], index: 1, kind: input, shape index: {}]
  %s2 = inlined_call_operand.hbm [shape: f32[2,7,16,128], index: 2, kind: output, shape index: {}]
  %s3 = sld [smem:[#allocation0]]
  $region49: #{tpu_custom_call.1} parent=0
    _
  %s5 = ssub.s32 1, %s3
  %s6 = scalar_select 0, %s5, %s3
  $region1: #{tpu_custom_call.1} parent=0
    #allocation2 [shape = 'u8[65536]{0}', space=vmem, size = 0x10000, scoped, tag = 'input window, operand 0']
    #allocation3 [shape = 's32[2]{0}', space=sflag, size = 0x8, scoped, tag = 'scoped memory for tpu_custom_call.1']
    #allocation4 [shape = 's32[2]{0}', space=sflag, size = 0x8, scoped, tag = 'scoped memory for tpu_custom_call.1']
    #allocation5 [shape = 'u8[65536]{0}', space=vmem, size = 0x10000, scoped, tag = 'input window, operand 1']
    #allocation6 [shape = 's32[2]{0}', space=sflag, size = 0x8, scoped, tag = 'scoped memory for tpu_custom_call.1']
    #allocation7 [shape = 'u8[114688]{0}', space=vmem, size = 0x1c000, scoped, tag = 'output window, operand 0']
    %7 = vsyncpa [#allocation3], 0
    %s8 = scalar_lea.sflag [#allocation3], 1
    %9 = vsyncpa %s8, 0
    %10 = vsyncpa [#allocation6], 0
    %s11 = scalar_lea.sflag [#allocation6], 1
    %12 = vsyncpa %s11, 0
    %13 = vsyncpa [#allocation4], 0
    %s14 = scalar_lea.sflag [#allocation4], 1
    %15 = vsyncpa %s14, 0
    loop: start=0, step=1, limit=4
    $region2: #{tpu_custom_call.1} parent=1 // loop_pre_header
      _
    $region3: #{tpu_custom_call.1} parent=1 // loop_header
      %s17 = sphi 0, %s21
      %p18 = scmp.ge.s32.totalorder %s17, 4
      %s24 = sphi 0, %s36
      %s25 = sphi 0, %s32
      %s26 = sphi 0, %s24
      %s27 = sphi 0, %s25
      %s28 = sphi 0, %s26
      %s29 = sphi 0, %s27
      %s41 = sphi 0, %s43
      %s44 = sphi 0, %s41
      %s45 = sphi 0, %s44
      %s61 = sphi 0, %s45
      %s69 = sphi 0, %s71
      %s72 = sphi 0, %s69
      %s73 = sphi 0, %s72
      %s89 = sphi 0, %s73
      %s97 = sphi 0, %s99
      %s100 = sphi 0, %s97
      %s101 = sphi 0, %s100
      %s117 = sphi 0, %s101
    $region4: #{tpu_custom_call.1} parent=1 // loop_header_branch
      %20 = sbr.rel (%p18) target = $region8
    $region5: #{tpu_custom_call.1} parent=1 // loop_body
      %s22 = ssub.s32 %s17, 1
      %s23 = ssub.s32 %s17, 2
      %s30 = sadd.s32 1, %s25
      %p31 = scmp.ge.s32.totalorder %s30, 1
      %s32 = scalar_select %p31, 0, %s30
      %s33 = sadd.s32 1, %s24
      %s34 = scalar_select %p31, %s33, %s24
      %p35 = scmp.ge.s32.totalorder %s34, 2
      %s36 = scalar_select %p35, 0, %s34
      %s37 = ssub.s32 %s24, %s36
      %s38 = ssub.s32 %s25, %s32
      %s39 = sor.u32 %s37, %s38
      %p40 = scmp.eq.s32.totalorder %s39, 0
      %s42 = sadd.s32 %s41, 1
      %s43 = scalar_select %p40, %s41, %s42
      %p46 = pneg %p40
      %p47 = scmp.eq.s32.totalorder %s17, 1
      %p48 = por %p46, %p47
      %p49 = scmp.ne.s32.totalorder %s41, %s44
      %p50 = scmp.eq.s32.totalorder %s17, 0
      %p51 = por %p49, %p50
      %p52 = scmp.ne.s32.totalorder %s41, %s44
      %p53 = scmp.eq.s32.totalorder %s22, 1
      %p54 = por %p52, %p53
      %p55 = scmp.ne.s32.totalorder %s44, %s45
      %p56 = scmp.eq.s32.totalorder %s22, 0
      %p57 = por %p55, %p56
      %p58 = scmp.ne.s32.totalorder %s44, %s45
      %p59 = scmp.eq.s32.totalorder %s23, 1
      %p60 = por %p58, %p59
      %p62 = scmp.ne.s32.totalorder %s45, %s61
      %p63 = scmp.eq.s32.totalorder %s23, 0
      %p64 = por %p62, %p63
      %s65 = ssub.s32 %s24, %s36
      %s66 = ssub.s32 %s25, %s32
      %s67 = sor.u32 %s65, %s66
      %p68 = scmp.eq.s32.totalorder %s67, 0
      %s70 = sadd.s32 %s69, 1
      %s71 = scalar_select %p68, %s69, %s70
      %p74 = pneg %p68
      %p75 = scmp.eq.s32.totalorder %s17, 1
      %p76 = por %p74, %p75
      %p77 = scmp.ne.s32.totalorder %s69, %s72
      %p78 = scmp.eq.s32.totalorder %s17, 0
      %p79 = por %p77, %p78
      %p80 = scmp.ne.s32.totalorder %s69, %s72
      %p81 = scmp.eq.s32.totalorder %s22, 1
      %p82 = por %p80, %p81
      %p83 = scmp.ne.s32.totalorder %s72, %s73
      %p84 = scmp.eq.s32.totalorder %s22, 0
      %p85 = por %p83, %p84
      %p86 = scmp.ne.s32.totalorder %s72, %s73
      %p87 = scmp.eq.s32.totalorder %s23, 1
      %p88 = por %p86, %p87
      %p90 = scmp.ne.s32.totalorder %s73, %s89
      %p91 = scmp.eq.s32.totalorder %s23, 0
      %p92 = por %p90, %p91
      %s93 = ssub.s32 %s24, %s36
      %s94 = ssub.s32 %s25, %s32
      %s95 = sor.u32 %s93, %s94
      %p96 = scmp.eq.s32.totalorder %s95, 0
      %s98 = sadd.s32 %s97, 1
      %s99 = scalar_select %p96, %s97, %s98
      %p102 = pneg %p96
      %p103 = scmp.eq.s32.totalorder %s17, 1
      %p104 = por %p102, %p103
      %p105 = scmp.ne.s32.totalorder %s97, %s100
      %p106 = scmp.eq.s32.totalorder %s17, 0
      %p107 = por %p105, %p106
      %p108 = scmp.ne.s32.totalorder %s97, %s100
      %p109 = scmp.eq.s32.totalorder %s22, 1
      %p110 = por %p108, %p109
      %p111 = scmp.ne.s32.totalorder %s100, %s101
      %p112 = scmp.eq.s32.totalorder %s22, 0
      %p113 = por %p111, %p112
      %p114 = scmp.ne.s32.totalorder %s100, %s101
      %p115 = scmp.eq.s32.totalorder %s23, 1
      %p116 = por %p114, %p115
      %p118 = scmp.ne.s32.totalorder %s101, %s117
      %p119 = scmp.eq.s32.totalorder %s23, 0
      %p120 = por %p118, %p119
      %p121 = scmp.le.s32.totalorder 1, %s17
      %p122 = scmp.lt.s32.totalorder %s17, 3
      %p123 = pnand %p121, %p122
      %p124 = pneg %p123
      // Predicated region
      $region9: #{tpu_custom_call.1} parent=5 // pred_check
        _
      $region10: #{tpu_custom_call.1} parent=5 // pred_check_branch
        %126 = sbr.rel (%p123) target = $region12
      $region11: #{tpu_custom_call.1} parent=5 // pred_region
        %s127 = ssub.s32 %s17, 1
      $region12: #{tpu_custom_call.1} parent=5 // pred_fallthru
        _
      %p128 = scmp.lt.s32.totalorder %s17, 2
      // Predicated region
      $region13: #{tpu_custom_call.1} parent=5 // pred_check
        %p129 = pneg %p128
      $region14: #{tpu_custom_call.1} parent=5 // pred_check_branch
        %131 = sbr.rel (%p129) target = $region16
      $region15: #{tpu_custom_call.1} parent=5 // pred_region
        // Predicated region
        $region17: #{tpu_custom_call.1} parent=15 // pred_check
          %p132 = pneg %p51
        $region18: #{tpu_custom_call.1} parent=15 // pred_check_branch
          %134 = sbr.rel (%p132) target = $region20
        $region19: #{tpu_custom_call.1} parent=15 // pred_region
          %s135 = sand.u32 %s41, 1
          %s136 = scalar_lea.sflag [#allocation3], %s135
          %s137 = sand.u32 %s41, 1
          %s138 = smul.addr %s137, 64
          %s139 = scalar_lea.vmem [#allocation2], %s138
          %s140 = smul.u32 2, %s25
          %142 = vsyncadd %s136, 0
          %s143 = smul.addr %s24, 8
          %s144 = sadd.s32 %s140, %s143
          %s145 = smul.addr %s144, 8
          %s146 = scalar_lea.hbm %s0, %s145
          %s147 = sshll.u32 %s146, 4
          %s148 = int_to_ptr.hbm [resolvable:$true] %s147
          %s149 = sshll.u32 %s139, 4
          %s150 = int_to_ptr.vmem [resolvable:$true] %s149
          %155 = dma.hbm_to_vmem [thread:$0]  %s148, 1024, %s150, %s136, 128, 128, 8
        $region20: #{tpu_custom_call.1} parent=15 // pred_fallthru
          _
        // Predicated region
        $region21: #{tpu_custom_call.1} parent=15 // pred_check
          %p156 = pneg %p79
        $region22: #{tpu_custom_call.1} parent=15 // pred_check_branch
          %158 = sbr.rel (%p156) target = $region24
        $region23: #{tpu_custom_call.1} parent=15 // pred_region
          %s159 = sand.u32 %s69, 1
          %s160 = scalar_lea.sflag [#allocation6], %s159
          %s161 = sand.u32 %s69, 1
          %s162 = smul.addr %s161, 64
          %s163 = scalar_lea.vmem [#allocation5], %s162
          %s164 = smul.u32 2, %s25
          %166 = vsyncadd %s160, 0
          %s167 = smul.addr %s24, 8
          %s168 = sadd.s32 %s164, %s167
          %s169 = smul.addr %s168, 8
          %s170 = scalar_lea.hbm %s1, %s169
          %s171 = sshll.u32 %s170, 4
          %s172 = int_to_ptr.hbm [resolvable:$true] %s171
          %s173 = sshll.u32 %s163, 4
          %s174 = int_to_ptr.vmem [resolvable:$true] %s173
          %179 = dma.hbm_to_vmem [thread:$0]  %s172, 1024, %s174, %s160, 128, 128, 8
        $region24: #{tpu_custom_call.1} parent=15 // pred_fallthru
          _
      $region16: #{tpu_custom_call.1} parent=5 // pred_fallthru
        _
      %p180 = scmp.le.s32.totalorder 1, %s17
      %p181 = scmp.lt.s32.totalorder %s17, 3
      %p182 = pnand %p180, %p181
      %p183 = pneg %p182
      // Predicated region
      $region25: #{tpu_custom_call.1} parent=5 // pred_check
        _
      $region26: #{tpu_custom_call.1} parent=5 // pred_check_branch
        %185 = sbr.rel (%p182) target = $region28
      $region27: #{tpu_custom_call.1} parent=5 // pred_region
        %s186 = ssub.s32 %s17, 1
        %s187 = sand.u32 %s44, 1
        %s188 = scalar_lea.sflag [#allocation3], %s187
        %s189 = sand.u32 %s44, 1
        %s190 = smul.addr %s189, 64
        %s191 = scalar_lea.vmem [#allocation2], %s190
        // Predicated region
        $region29: #{tpu_custom_call.1} parent=27 // pred_check
          %p192 = pneg %p57
        $region30: #{tpu_custom_call.1} parent=27 // pred_check_branch
          %194 = sbr.rel (%p192) target = $region32
        $region31: #{tpu_custom_call.1} parent=27 // pred_region
          %196 = dma.done %s188, 1024
        $region32: #{tpu_custom_call.1} parent=27 // pred_fallthru
          _
        %s197 = sand.u32 %s72, 1
        %s198 = scalar_lea.sflag [#allocation6], %s197
        %s199 = sand.u32 %s72, 1
        %s200 = smul.addr %s199, 64
        %s201 = scalar_lea.vmem [#allocation5], %s200
        // Predicated region
        $region33: #{tpu_custom_call.1} parent=27 // pred_check
          %p202 = pneg %p85
        $region34: #{tpu_custom_call.1} parent=27 // pred_check_branch
          %204 = sbr.rel (%p202) target = $region36
        $region35: #{tpu_custom_call.1} parent=27 // pred_region
          %206 = dma.done %s198, 1024
        $region36: #{tpu_custom_call.1} parent=27 // pred_fallthru
          _
        %s207 = sand.u32 %s44, 1
        %s208 = scalar_lea.sflag [#allocation3], %s207
        %s209 = sand.u32 %s44, 1
        %s210 = smul.addr %s209, 64
        %s211 = scalar_lea.vmem [#allocation2], %s210
        %p212 = pneg %p57
        %p213 = pneg %p54
        %s214 = sand.u32 %s72, 1
        %s215 = scalar_lea.sflag [#allocation6], %s214
        %s216 = sand.u32 %s72, 1
        %s217 = smul.addr %s216, 64
        %s218 = scalar_lea.vmem [#allocation5], %s217
        %p219 = pneg %p85
        %p220 = pneg %p82
        %p221 = pneg %p113
        %p222 = pneg %p110
        %s223 = sand.u32 %s100, 1
        %s224 = scalar_lea.sflag [#allocation4], %s223
        %s225 = sand.u32 %s100, 1
        %s226 = smul.addr %s225, 112
        %s227 = scalar_lea.vmem [#allocation7], %s226
        %s228 = smul.u32 2, %s27
        %s229 = smul.u32 2, %s27
        %s230 = smul.u32 2, %s27
        %v231 = vlaneseq
        %v232 = vand.u32 %v231, 127
        %v233 = vld [vmem:[%s191] sm:$0xff]
        %v234 = vld [vmem:[%s191 + $0x8] sm:$0xff]
        %v235 = vld [vmem:[%s191 + $0x10] sm:$0xff]
        %v236 = vld [vmem:[%s191 + $0x18] sm:$0xff]
        %v237 = vld [vmem:[%s191 + $0x20] sm:$0xff]
        %v238 = vld [vmem:[%s191 + $0x28] sm:$0xff]
        %v239 = vld [vmem:[%s191 + $0x30] sm:$0xff]
        %v240 = vld [vmem:[%s191 + $0x38] sm:$0xff]
        %v241 = vld [vmem:[%s201] sm:$0xff]
        %v242 = vld [vmem:[%s201 + $0x8] sm:$0xff]
        %v243 = vld [vmem:[%s201 + $0x10] sm:$0xff]
        %v244 = vld [vmem:[%s201 + $0x18] sm:$0xff]
        %v245 = vld [vmem:[%s201 + $0x20] sm:$0xff]
        %v246 = vld [vmem:[%s201 + $0x28] sm:$0xff]
        %v247 = vld [vmem:[%s201 + $0x30] sm:$0xff]
        %v248 = vld [vmem:[%s201 + $0x38] sm:$0xff]
        %249 = vrot.lane.b32.xlu0 %v241, 125
        %v250 = vpop.permute.xlu0 %249
        %251 = vrot.lane.b32.xlu0 %v242, 125
        %v252 = vpop.permute.xlu0 %251
        %253 = vrot.lane.b32.xlu0 %v243, 125
        %v254 = vpop.permute.xlu0 %253
        %255 = vrot.lane.b32.xlu0 %v244, 125
        %v256 = vpop.permute.xlu0 %255
        %257 = vrot.lane.b32.xlu0 %v245, 125
        %v258 = vpop.permute.xlu0 %257
        %259 = vrot.lane.b32.xlu0 %v246, 125
        %v260 = vpop.permute.xlu0 %259
        %261 = vrot.lane.b32.xlu0 %v247, 125
        %v262 = vpop.permute.xlu0 %261
        %263 = vrot.lane.b32.xlu0 %v248, 125
        %v264 = vpop.permute.xlu0 %263
        %v265 = vmul.f32 %v233, %v250
        %v266 = vmul.f32 %v234, %v252
        %v267 = vmul.f32 %v235, %v254
        %v268 = vmul.f32 %v236, %v256
        %v269 = vmul.f32 %v237, %v258
        %v270 = vmul.f32 %v238, %v260
        %v271 = vmul.f32 %v239, %v262
        %v272 = vmul.f32 %v240, %v264
        %v273 = vadd.f32 %v265, %v267
        %v274 = vadd.f32 %v273, %v269
        %v275 = vadd.f32 %v274, %v271
        %v276 = vadd.f32 %v266, %v268
        %v277 = vadd.f32 %v276, %v270
        %v278 = vadd.f32 %v277, %v272
        %v279 = vadd.f32 %v275, 0.0
        %v280 = vadd.f32 %v278, 0.0
        %281 = vrot.lane.b32.xlu0 %v241, 126
        %v282 = vpop.permute.xlu0 %281
        %283 = vrot.lane.b32.xlu0 %v242, 126
        %v284 = vpop.permute.xlu0 %283
        %285 = vrot.lane.b32.xlu0 %v243, 126
        %v286 = vpop.permute.xlu0 %285
        %287 = vrot.lane.b32.xlu0 %v244, 126
        %v288 = vpop.permute.xlu0 %287
        %289 = vrot.lane.b32.xlu0 %v245, 126
        %v290 = vpop.permute.xlu0 %289
        %291 = vrot.lane.b32.xlu0 %v246, 126
        %v292 = vpop.permute.xlu0 %291
        %293 = vrot.lane.b32.xlu0 %v247, 126
        %v294 = vpop.permute.xlu0 %293
        %295 = vrot.lane.b32.xlu0 %v248, 126
        %v296 = vpop.permute.xlu0 %295
        %v297 = vmul.f32 %v233, %v282
        %v298 = vmul.f32 %v234, %v284
        %v299 = vmul.f32 %v235, %v286
        %v300 = vmul.f32 %v236, %v288
        %v301 = vmul.f32 %v237, %v290
        %v302 = vmul.f32 %v238, %v292
        %v303 = vmul.f32 %v239, %v294
        %v304 = vmul.f32 %v240, %v296
        %v305 = vadd.f32 %v297, %v299
        %v306 = vadd.f32 %v305, %v301
        %v307 = vadd.f32 %v306, %v303
        %v308 = vadd.f32 %v298, %v300
        %v309 = vadd.f32 %v308, %v302
        %v310 = vadd.f32 %v309, %v304
        %v311 = vadd.f32 %v307, 0.0
        %v312 = vadd.f32 %v310, 0.0
        %313 = vrot.lane.b32.xlu0 %v241, 127
        %v314 = vpop.permute.xlu0 %313
        %315 = vrot.lane.b32.xlu0 %v242, 127
        %v316 = vpop.permute.xlu0 %315
        %317 = vrot.lane.b32.xlu0 %v243, 127
        %v318 = vpop.permute.xlu0 %317
        %319 = vrot.lane.b32.xlu0 %v244, 127
        %v320 = vpop.permute.xlu0 %319
        %321 = vrot.lane.b32.xlu0 %v245, 127
        %v322 = vpop.permute.xlu0 %321
        %323 = vrot.lane.b32.xlu0 %v246, 127
        %v324 = vpop.permute.xlu0 %323
        %325 = vrot.lane.b32.xlu0 %v247, 127
        %v326 = vpop.permute.xlu0 %325
        %327 = vrot.lane.b32.xlu0 %v248, 127
        %v328 = vpop.permute.xlu0 %327
        %v329 = vmul.f32 %v233, %v314
        %v330 = vmul.f32 %v234, %v316
        %v331 = vmul.f32 %v235, %v318
        %v332 = vmul.f32 %v236, %v320
        %v333 = vmul.f32 %v237, %v322
        %v334 = vmul.f32 %v238, %v324
        %v335 = vmul.f32 %v239, %v326
        %v336 = vmul.f32 %v240, %v328
        %v337 = vadd.f32 %v329, %v331
        %v338 = vadd.f32 %v337, %v333
        %v339 = vadd.f32 %v338, %v335
        %v340 = vadd.f32 %v330, %v332
        %v341 = vadd.f32 %v340, %v334
        %v342 = vadd.f32 %v341, %v336
        %v343 = vadd.f32 %v339, 0.0
        %v344 = vadd.f32 %v342, 0.0
        %v345 = vmul.f32 %v233, %v241
        %v346 = vmul.f32 %v234, %v242
        %v347 = vmul.f32 %v235, %v243
        %v348 = vmul.f32 %v236, %v244
        %v349 = vmul.f32 %v237, %v245
        %v350 = vmul.f32 %v238, %v246
        %v351 = vmul.f32 %v239, %v247
        %v352 = vmul.f32 %v240, %v248
        %v353 = vadd.f32 %v345, %v347
        %v354 = vadd.f32 %v353, %v349
        %v355 = vadd.f32 %v354, %v351
        %v356 = vadd.f32 %v346, %v348
        %v357 = vadd.f32 %v356, %v350
        %v358 = vadd.f32 %v357, %v352
        %v359 = vadd.f32 %v355, 0.0
        %v360 = vadd.f32 %v358, 0.0
        %361 = vrot.lane.b32.xlu0 %v241, 1
        %v362 = vpop.permute.xlu0 %361
        %363 = vrot.lane.b32.xlu0 %v242, 1
        %v364 = vpop.permute.xlu0 %363
        %365 = vrot.lane.b32.xlu0 %v243, 1
        %v366 = vpop.permute.xlu0 %365
        %367 = vrot.lane.b32.xlu0 %v244, 1
        %v368 = vpop.permute.xlu0 %367
        %369 = vrot.lane.b32.xlu0 %v245, 1
        %v370 = vpop.permute.xlu0 %369
        %371 = vrot.lane.b32.xlu0 %v246, 1
        %v372 = vpop.permute.xlu0 %371
        %373 = vrot.lane.b32.xlu0 %v247, 1
        %v374 = vpop.permute.xlu0 %373
        %375 = vrot.lane.b32.xlu0 %v248, 1
        %v376 = vpop.permute.xlu0 %375
        %v377 = vmul.f32 %v233, %v362
        %v378 = vmul.f32 %v234, %v364
        %v379 = vmul.f32 %v235, %v366
        %v380 = vmul.f32 %v236, %v368
        %v381 = vmul.f32 %v237, %v370
        %v382 = vmul.f32 %v238, %v372
        %v383 = vmul.f32 %v239, %v374
        %v384 = vmul.f32 %v240, %v376
        %v385 = vadd.f32 %v377, %v379
        %v386 = vadd.f32 %v385, %v381
        %v387 = vadd.f32 %v386, %v383
        %v388 = vadd.f32 %v378, %v380
        %v389 = vadd.f32 %v388, %v382
        %v390 = vadd.f32 %v389, %v384
        %v391 = vadd.f32 %v387, 0.0
        %v392 = vadd.f32 %v390, 0.0
        %393 = vrot.lane.b32.xlu0 %v241, 2
        %v394 = vpop.permute.xlu0 %393
        %395 = vrot.lane.b32.xlu0 %v242, 2
        %v396 = vpop.permute.xlu0 %395
        %397 = vrot.lane.b32.xlu0 %v243, 2
        %v398 = vpop.permute.xlu0 %397
        %399 = vrot.lane.b32.xlu0 %v244, 2
        %v400 = vpop.permute.xlu0 %399
        %401 = vrot.lane.b32.xlu0 %v245, 2
        %v402 = vpop.permute.xlu0 %401
        %403 = vrot.lane.b32.xlu0 %v246, 2
        %v404 = vpop.permute.xlu0 %403
        %405 = vrot.lane.b32.xlu0 %v247, 2
        %v406 = vpop.permute.xlu0 %405
        %407 = vrot.lane.b32.xlu0 %v248, 2
        %v408 = vpop.permute.xlu0 %407
        %v409 = vmul.f32 %v233, %v394
        %v410 = vmul.f32 %v234, %v396
        %v411 = vmul.f32 %v235, %v398
        %v412 = vmul.f32 %v236, %v400
        %v413 = vmul.f32 %v237, %v402
        %v414 = vmul.f32 %v238, %v404
        %v415 = vmul.f32 %v239, %v406
        %v416 = vmul.f32 %v240, %v408
        %v417 = vadd.f32 %v409, %v411
        %v418 = vadd.f32 %v417, %v413
        %v419 = vadd.f32 %v418, %v415
        %v420 = vadd.f32 %v410, %v412
        %v421 = vadd.f32 %v420, %v414
        %v422 = vadd.f32 %v421, %v416
        %v423 = vadd.f32 %v419, 0.0
        %v424 = vadd.f32 %v422, 0.0
        %425 = vrot.lane.b32.xlu0 %v241, 3
        %v426 = vpop.permute.xlu0 %425
        %427 = vrot.lane.b32.xlu0 %v242, 3
        %v428 = vpop.permute.xlu0 %427
        %429 = vrot.lane.b32.xlu0 %v243, 3
        %v430 = vpop.permute.xlu0 %429
        %431 = vrot.lane.b32.xlu0 %v244, 3
        %v432 = vpop.permute.xlu0 %431
        %433 = vrot.lane.b32.xlu0 %v245, 3
        %v434 = vpop.permute.xlu0 %433
        %435 = vrot.lane.b32.xlu0 %v246, 3
        %v436 = vpop.permute.xlu0 %435
        %437 = vrot.lane.b32.xlu0 %v247, 3
        %v438 = vpop.permute.xlu0 %437
        %439 = vrot.lane.b32.xlu0 %v248, 3
        %v440 = vpop.permute.xlu0 %439
        %v441 = vmul.f32 %v233, %v426
        %v442 = vmul.f32 %v234, %v428
        %v443 = vmul.f32 %v235, %v430
        %v444 = vmul.f32 %v236, %v432
        %v445 = vmul.f32 %v237, %v434
        %v446 = vmul.f32 %v238, %v436
        %v447 = vmul.f32 %v239, %v438
        %v448 = vmul.f32 %v240, %v440
        %v449 = vadd.f32 %v441, %v443
        %v450 = vadd.f32 %v449, %v445
        %v451 = vadd.f32 %v450, %v447
        %v452 = vadd.f32 %v442, %v444
        %v453 = vadd.f32 %v452, %v446
        %v454 = vadd.f32 %v453, %v448
        %v455 = vadd.f32 %v451, 0.0
        %v456 = vadd.f32 %v454, 0.0
        %v457 = vmul.f32 %v279, 0.25
        %v458 = vmul.f32 %v280, 0.25
        %vm459 = vcmp.lt.s32.totalorder %v232, 125
        %v460 = vsel %vm459, %v457, 0.0
        %v461 = vsel %vm459, %v458, 0.0
        %462 = vst [vmem:[%s227] sm:$0xff] %v460
        %463 = vst [vmem:[%s227 + $0x8] sm:$0xff] %v461
        %v464 = vmul.f32 %v311, 0.25
        %v465 = vmul.f32 %v312, 0.25
        %vm466 = vcmp.lt.s32.totalorder %v232, 126
        %v467 = vsel %vm466, %v464, 0.0
        %v468 = vsel %vm466, %v465, 0.0
        %s469 = scalar_lea.vmem %s227, 16 [#allocation7]
        %470 = vst [vmem:[%s469] sm:$0xff] %v467
        %471 = vst [vmem:[%s469 + $0x8] sm:$0xff] %v468
        %v472 = vmul.f32 %v343, 0.25
        %v473 = vmul.f32 %v344, 0.25
        %vm474 = vcmp.lt.s32.totalorder %v232, 127
        %v475 = vsel %vm474, %v472, 0.0
        %v476 = vsel %vm474, %v473, 0.0
        %s477 = scalar_lea.vmem %s227, 32 [#allocation7]
        %478 = vst [vmem:[%s477] sm:$0xff] %v475
        %479 = vst [vmem:[%s477 + $0x8] sm:$0xff] %v476
        %v480 = vmul.f32 %v359, 0.25
        %v481 = vmul.f32 %v360, 0.25
        %s482 = scalar_lea.vmem %s227, 48 [#allocation7]
        %483 = vst [vmem:[%s482] sm:$0xff] %v480
        %484 = vst [vmem:[%s482 + $0x8] sm:$0xff] %v481
        %v485 = vmul.f32 %v391, 0.25
        %v486 = vmul.f32 %v392, 0.25
        %vm487 = vcmp.ge.s32.totalorder %v232, 1
        %v488 = vsel %vm487, %v485, 0.0
        %v489 = vsel %vm487, %v486, 0.0
        %s490 = scalar_lea.vmem %s227, 64 [#allocation7]
        %491 = vst [vmem:[%s490] sm:$0xff] %v488
        %492 = vst [vmem:[%s490 + $0x8] sm:$0xff] %v489
        %v493 = vmul.f32 %v423, 0.25
        %v494 = vmul.f32 %v424, 0.25
        %vm495 = vcmp.ge.s32.totalorder %v232, 2
        %v496 = vsel %vm495, %v493, 0.0
        %v497 = vsel %vm495, %v494, 0.0
        %s498 = scalar_lea.vmem %s227, 80 [#allocation7]
        %499 = vst [vmem:[%s498] sm:$0xff] %v496
        %500 = vst [vmem:[%s498 + $0x8] sm:$0xff] %v497
        %v501 = vmul.f32 %v455, 0.25
        %v502 = vmul.f32 %v456, 0.25
        %vm503 = vcmp.ge.s32.totalorder %v232, 3
        %v504 = vsel %vm503, %v501, 0.0
        %v505 = vsel %vm503, %v502, 0.0
        %s506 = scalar_lea.vmem %s227, 96 [#allocation7]
        %507 = vst [vmem:[%s506] sm:$0xff] %v504
        %508 = vst [vmem:[%s506 + $0x8] sm:$0xff] %v505
        %s509 = sand.u32 %s100, 1
        %s510 = scalar_lea.sflag [#allocation4], %s509
        %s511 = sand.u32 %s100, 1
        %s512 = smul.addr %s511, 112
        %s513 = scalar_lea.vmem [#allocation7], %s512
        // Predicated region
        $region37: #{tpu_custom_call.1} parent=27 // pred_check
          %p514 = pneg %p110
        $region38: #{tpu_custom_call.1} parent=27 // pred_check_branch
          %516 = sbr.rel (%p514) target = $region40
        $region39: #{tpu_custom_call.1} parent=27 // pred_region
          %s517 = smul.u32 2, %s27
          %519 = vsyncadd %s510, 0
          %s520 = smul.addr %s26, 14
          %s521 = sadd.s32 %s517, %s520
          %s522 = smul.addr %s521, 8
          %s523 = scalar_lea.hbm %s2, %s522
          %s524 = sshll.u32 %s513, 4
          %s525 = int_to_ptr.vmem [resolvable:$true] %s524
          %s526 = sshll.u32 %s523, 4
          %s527 = int_to_ptr.hbm [resolvable:$true] %s526
          %532 = dma.vmem_to_hbm [thread:$0]  %s525, 1792, %s527, %s510, 128, 128, 8
        $region40: #{tpu_custom_call.1} parent=27 // pred_fallthru
          _
      $region28: #{tpu_custom_call.1} parent=5 // pred_fallthru
        _
      %p533 = scmp.le.s32.totalorder 2, %s17
      // Predicated region
      $region41: #{tpu_custom_call.1} parent=5 // pred_check
        %p534 = pneg %p533
      $region42: #{tpu_custom_call.1} parent=5 // pred_check_branch
        %536 = sbr.rel (%p534) target = $region44
      $region43: #{tpu_custom_call.1} parent=5 // pred_region
        %s537 = ssub.s32 %s17, 2
        // Predicated region
        $region45: #{tpu_custom_call.1} parent=43 // pred_check
          %p538 = pneg %p116
        $region46: #{tpu_custom_call.1} parent=43 // pred_check_branch
          %540 = sbr.rel (%p538) target = $region48
        $region47: #{tpu_custom_call.1} parent=43 // pred_region
          %s541 = sand.u32 %s101, 1
          %s542 = scalar_lea.sflag [#allocation4], %s541
          %s543 = sand.u32 %s101, 1
          %s544 = smul.addr %s543, 112
          %s545 = scalar_lea.vmem [#allocation7], %s544
          %547 = dma.done %s542, 1792
        $region48: #{tpu_custom_call.1} parent=43 // pred_fallthru
          _
      $region44: #{tpu_custom_call.1} parent=5 // pred_fallthru
        _
    $region6: #{tpu_custom_call.1} parent=1 // loop_footer
      %s21 = sadd.s32 1, %s17
    $region7: #{tpu_custom_call.1} parent=1 // loop_footer_branch
      %16 = sbr.rel target = $region3
    $region8: #{tpu_custom_call.1} parent=1 // loop_exit
      _
    %548 = vsyncpa [#allocation3], 1
    %s549 = scalar_lea.sflag [#allocation3], 1
    %550 = vsyncpa %s549, 1
    %551 = vsyncpa [#allocation6], 1
    %s552 = scalar_lea.sflag [#allocation6], 1
    %553 = vsyncpa %s552, 1
    %554 = vsyncpa [#allocation4], 1
    %s555 = scalar_lea.sflag [#allocation4], 1
    %556 = vsyncpa %s555, 1

</llo_original>
